<compile_context>
chip_gen: v6e
topology: v6e:2x2x1
jax: 0.10.0
libtpu: 0.0.40
codegen_flags: <defaults>
</compile_context>

<pallas_src>
import functools

import numpy as np
import jax
import jax.numpy as jnp
from jax import lax
from jax.experimental import pallas as pl
from jax.experimental.pallas import tpu as pltpu

EPS = 1e-8


def _transform_loss_kernel(iv_ref, nv_ref, iu_ref, pu_ref,          # inputs  (TN, D)
                           u_ref, mse_ref, cnt_ref,                 # outputs (1,1,D),(1,1,D),(1,1,1) per shard
                           *, n_rows, tile_rows, tiles_per_shard, alpha, betta):
    s = pl.program_id(0)          # row shard ("parallel"; a TensorCore on v7x)
    t = pl.program_id(1)          # streaming tile within the shard ("arbitrary")

    @pl.when(t == 0)
    def _init():
        u_ref[...] = jnp.zeros_like(u_ref)
        mse_ref[...] = jnp.zeros_like(mse_ref)
        cnt_ref[...] = jnp.zeros_like(cnt_ref)

    d1 = iv_ref[...].astype(jnp.float32) - nv_ref[...].astype(jnp.float32)   # diff_img
    d2 = iu_ref[...].astype(jnp.float32) - pu_ref[...].astype(jnp.float32)   # diff_unclip

    # Logical (unclamped) tile index -> absolute row ids.  Rows >= n_rows are
    # ragged-tail / overshoot garbage: they are masked out of every accumulator,
    # so the wrapper never pads the inputs.
    tile = s * tiles_per_shard + t
    row = lax.broadcasted_iota(jnp.int32, (tile_rows, 1), 0) + tile * tile_rows
    in_range = row < n_rows                                                  # (TN, 1)

    # Five lane reductions on the raw diffs; everything else is per-row scalars.
    ss1 = jnp.sum(d1 * d1, axis=-1, keepdims=True)     # ||vec_1||^2
    ss2 = jnp.sum(d2 * d2, axis=-1, keepdims=True)     # ||vec_2||^2
    p = jnp.sum(d1 * d2, axis=-1, keepdims=True)       # <vec_1, vec_2>
    s_i = jnp.sum(d1, axis=-1, keepdims=True)          # rowsum(vec_1)
    s_u = jnp.sum(d2, axis=-1, keepdims=True)          # rowsum(vec_2)

    # Row filter: real row AND ||diff_img|| > 1e-8 (the torch boolean row drop).
    valid = jnp.logical_and(in_range, ss1 > EPS * EPS)                       # (TN, 1)

    # rsqrt-multiply (EUP) with guarded divisors; garbage/NaN rows stay harmless
    # because every contribution is gated by `valid` / `in_range` selects.
    r1 = lax.rsqrt(jnp.where(valid, ss1, 1.0))          # 1/||vec_1||
    inv_ss1 = r1 * r1
    r2 = lax.rsqrt(jnp.where(ss2 > 0.0, ss2, 1.0))      # 1/||vec_2||

    # a = arccos(clip(<n1, u2>, -1, 1)); only sin(a) and cos(a)-1 are needed.
    c = jnp.clip(p * (r1 * r2), -1.0, 1.0)
    sin_a = jnp.sqrt(jnp.maximum(1.0 - c * c, 0.0))
    cm1 = c - 1.0

    # Gram-Schmidt in coefficient form: w = d2 - beta_c*d1, n2 = w * rw.
    # TODO(synk): rows with ||vec_2||==0 or vec_2 parallel to vec_1 get a safe
    # divisor and stay finite; torch produces NaN there, which after the column
    # mean + nan_to_num zeroes the whole loss_u column (documented divergence).
    beta_c = p * inv_ss1
    ssw = jnp.maximum(ss2 - p * p * inv_ss1, 0.0)
    rw = lax.rsqrt(jnp.where(ssw > 0.0, ssw, 1.0))

    # bmm(transform, ones) collapsed: u_t = C1*d1 + C2*d2 with per-row scalars.
    s1 = s_i * r1                                        # rowsum(n1)
    s2 = (s_u - beta_c * s_i) * rw                       # rowsum(n2)
    a_sin = alpha * sin_a
    b_cm1 = betta * cm1
    c1 = -a_sin * (rw * s1 * beta_c + r1 * s2) + b_cm1 * (r1 * s1 - rw * s2 * beta_c)
    c2 = a_sin * (rw * s1) + b_cm1 * (rw * s2)
    u_t = c1 * d1 + c2 * d2                              # (TN, D) == transform @ ones

    # Masked streaming accumulation into the VMEM-resident per-shard partials.
    # TODO(synk): an (8, D) sublane-partial scratch with a single fold at
    # finalize would shave a few %; with MiB-class tiles it is already amortized.
    u_ref[...] += jnp.sum(jnp.where(valid, u_t * u_t, 0.0), axis=0, keepdims=True)
    cnt_ref[...] += jnp.sum(valid.astype(jnp.float32), axis=0, keepdims=True)
    d = d1 - d2
    mse_ref[...] += jnp.sum(jnp.where(in_range, d * d, 0.0), axis=0, keepdims=True)


def _vmem_budget_bytes():
    """Generation-aware VMEM budget with headroom (v7x only has 64 MiB per TC)."""
    try:
        cap = int(pltpu.get_tpu_info().vmem_capacity_bytes)
    except Exception:
        cap = 64 << 20                      # conservative fallback: assume v7x
    return max(16 << 20, (cap * 3) // 4)


def _choose_tile_rows(n_rows, d, itemsize, vmem_budget, block_rows):
    if n_rows <= 8:
        return n_rows                       # single full-extent block
    if block_rows is not None:
        tn = int(block_rows)
    else:
        # ~2 MiB per input tile so the ~0.35us/step grid overhead is amortized,
        # clamped so 4 double-buffered inputs + f32 temporaries fit the budget.
        tn = max(512, (2 << 20) // max(1, d * itemsize))
        per_row_bytes = 4 * 2 * d * itemsize + 6 * 4 * d
        tn = min(tn, max(8, (vmem_budget // 2) // per_row_bytes))
    tn = max(8, min(tn, n_rows))
    return (tn // 8) * 8                    # multiple of 8 sublanes


def transform_loss(init_img_vec, next_img_vec, init_unclip, pred_unclip,
                   *, weight_rote=0.5, weight_mse=0.5, alpha=1.0, betta=1.0,
                   block_rows=None):
    """Pallas TPU implementation of TransformLoss.forward.

    Returns (weight_rote * loss_u, weight_mse * mse_loss), each of shape (D,)."""
    def prep(x):
        x = jnp.asarray(x)
        if x.ndim == 3:                     # (N, 1, D) -> (N, D), mirrors squeeze(dim=1)
            x = jnp.squeeze(x, axis=1)
        if x.dtype not in (jnp.float32, jnp.bfloat16):
            x = x.astype(jnp.float32)       # bf16 passes through; upcast happens in-kernel
        return x

    iv, nv, iu, pu = (prep(a) for a in (init_img_vec, next_img_vec, init_unclip, pred_unclip))
    n_rows, d = iv.shape
    itemsize = max(int(a.dtype.itemsize) for a in (iv, nv, iu, pu))

    vmem_budget = _vmem_budget_bytes()
    tn = _choose_tile_rows(n_rows, d, itemsize, vmem_budget, block_rows)
    n_tiles = -(-n_rows // tn)
    num_shards = 2 if n_tiles >= 2 else 1   # megacore sharding on v7x; ~free on 1-TC chips
    tps = -(-n_tiles // num_shards)         # tiles per shard
    max_block = n_tiles - 1

    def in_map(s, t):
        # Clamp so a fully-out-of-range tile re-reads the last real block; the
        # kernel's row mask (computed from the unclamped logical index) zeroes it.
        return (jnp.minimum(s * tps + t, max_block), 0)

    kernel = functools.partial(
        _transform_loss_kernel,
        n_rows=n_rows, tile_rows=tn, tiles_per_shard=tps,
        alpha=float(alpha), betta=float(betta))

    grid_spec = pltpu.PrefetchScalarGridSpec(
        num_scalar_prefetch=0,
        grid=(num_shards, tps),
        in_specs=[pl.BlockSpec((tn, d), in_map) for _ in range(4)],
        out_specs=[pl.BlockSpec((1, 1, d), lambda s, t: (s, 0, 0)),
                   pl.BlockSpec((1, 1, d), lambda s, t: (s, 0, 0)),
                   pl.BlockSpec((1, 1, 1), lambda s, t: (s, 0, 0))],
    )

    pipeline_bytes = 4 * 2 * tn * d * itemsize            # 4 inputs, double-buffered
    temps_bytes = 8 * tn * d * 4                          # f32 intermediates headroom
    vmem_limit = int(min(vmem_budget, max(16 << 20, pipeline_bytes + temps_bytes + (4 << 20))))

    u_part, mse_part, cnt_part = pl.pallas_call(
        kernel,
        out_shape=(jax.ShapeDtypeStruct((num_shards, 1, d), jnp.float32),
                   jax.ShapeDtypeStruct((num_shards, 1, d), jnp.float32),
                   jax.ShapeDtypeStruct((num_shards, 1, 1), jnp.float32)),
        grid_spec=grid_spec,
        compiler_params=pltpu.CompilerParams(
            dimension_semantics=("parallel", "arbitrary"),
            vmem_limit_bytes=vmem_limit),
    )(iv, nv, iu, pu)

    # Cross-shard combine + finalize on tiny (num_shards, D) arrays.
    cnt = jnp.sum(cnt_part)
    u_sum = jnp.sum(u_part[:, 0, :], axis=0)
    mse_sum = jnp.sum(mse_part[:, 0, :], axis=0)
    # Mean over the filtered rows; torch's mean over 0 rows is NaN -> nan_to_num -> 0.
    mean_u = jnp.where(cnt > 0.0, u_sum / jnp.maximum(cnt, 1.0), 0.0)
    loss_u = weight_rote * jnp.nan_to_num(mean_u, nan=0.0, posinf=0.1, neginf=-0.1)
    # loss_I = nan_to_num(mean(MSE(I @ 1, 1))) == 0 identically, so it adds nothing.
    mse_loss = weight_mse * (mse_sum / n_rows)
    return loss_u, mse_loss


def _reference_numpy(init_img_vec, next_img_vec, init_unclip, pred_unclip,
                     weight_rote=0.5, weight_mse=0.5, alpha=1.0, betta=1.0):
    """Pure-numpy mirror of the PyTorch forward (standard RotationVectors)."""
    def prep(x):
        x = np.asarray(x, np.float64)
        if x.ndim == 3:
            x = x.squeeze(1)
        return x

    iv, nv, iu, pu = (prep(a) for a in (init_img_vec, next_img_vec, init_unclip, pred_unclip))
    diff_img, diff_unc = iv - nv, iu - pu
    D = diff_img.shape[-1]
    mask = np.linalg.norm(diff_img, axis=-1) > 1e-8
    v1, v2 = diff_img[mask], diff_unc[mask]

    def unit(v):
        return v / np.linalg.norm(v, axis=-1, keepdims=True)

    if v1.shape[0] > 0:
        n1 = unit(v1)
        c = np.clip(np.sum(unit(v1) * unit(v2), axis=-1), -1.0, 1.0)
        a = np.arccos(c)
        n2 = unit(v2 - n1 * np.sum(n1 * v2, axis=1, keepdims=True))
        sin_a = np.sin(a)[:, None, None]
        cm1 = (np.cos(a) - 1.0)[:, None, None]
        ta = (n2[:, :, None] * n1[:, None, :] - n1[:, :, None] * n2[:, None, :]) * sin_a
        tb = (n1[:, :, None] * n1[:, None, :] + n2[:, :, None] * n2[:, None, :]) * cm1
        T = alpha * ta + betta * tb
        ones = np.ones_like(v1)
        u_t = np.einsum("nij,nj->ni", T, ones)
        loss_u = (u_t ** 2).mean(axis=0)
    else:
        loss_u = np.full((D,), np.nan)
    loss_u = np.nan_to_num(loss_u, nan=0.0, posinf=0.1, neginf=-0.1)
    loss_I = np.zeros((D,))                       # MSE(I @ 1, 1) == 0 (or NaN->0 if empty)
    mse = ((diff_img - diff_unc) ** 2).mean(axis=0) + loss_I
    return weight_rote * loss_u, weight_mse * mse


if __name__ == "__main__":
    N, D = 90, 32                                 # small demo shapes; inputs are (N, 1, D)
    key = jax.random.PRNGKey(0)
    k1, k2, k3, k4 = jax.random.split(key, 4)
    init_img_vec = jax.random.normal(k1, (N, 1, D), dtype=jnp.float32)
    next_img_vec = jax.random.normal(k2, (N, 1, D), dtype=jnp.float32)
    init_unclip = jax.random.normal(k3, (N, 1, D), dtype=jnp.float32)
    pred_unclip = jax.random.normal(k4, (N, 1, D), dtype=jnp.float32)
    # Two rows with diff_img == 0 exercise the norm-based row filter.
    next_img_vec = next_img_vec.at[3].set(init_img_vec[3])
    next_img_vec = next_img_vec.at[40].set(init_img_vec[40])

    ref_u, ref_mse = _reference_numpy(np.asarray(init_img_vec), np.asarray(next_img_vec),
                                      np.asarray(init_unclip), np.asarray(pred_unclip))

    # block_rows=32 with N=90 -> 3 row tiles over 2 shards: exercises the ragged
    # last tile (no wrapper padding), shard 1's clamped overshoot tile, and the
    # per-shard accumulator init path.
    loss_u, mse_loss = transform_loss(init_img_vec, next_img_vec, init_unclip, pred_unclip,
                                      block_rows=32)
    jax.block_until_ready((loss_u, mse_loss))
    np.testing.assert_allclose(np.asarray(loss_u), ref_u, rtol=1e-3, atol=1e-6)
    np.testing.assert_allclose(np.asarray(mse_loss), ref_mse, rtol=1e-3, atol=1e-6)

    # Default (bytes-sized tile) configuration: 88-row tile + 2-row ragged tail.
    loss_u2, mse_loss2 = transform_loss(init_img_vec, next_img_vec, init_unclip, pred_unclip)
    jax.block_until_ready((loss_u2, mse_loss2))
    np.testing.assert_allclose(np.asarray(loss_u2), ref_u, rtol=1e-3, atol=1e-6)
    np.testing.assert_allclose(np.asarray(mse_loss2), ref_mse, rtol=1e-3, atol=1e-6)

    print("KERNEL_OK")
</pallas_src>

<mosaic_0001>
module attributes {stable_mosaic.version = 11 : i64} {
  func.func @_transform_loss_kernel(%arg0: i32, %arg1: i32, %arg2: memref<32x32xf32, #tpu.memory_space<vmem>>, %arg3: memref<32x32xf32, #tpu.memory_space<vmem>>, %arg4: memref<32x32xf32, #tpu.memory_space<vmem>>, %arg5: memref<32x32xf32, #tpu.memory_space<vmem>>, %arg6: memref<1x1x32xf32, #tpu.memory_space<vmem>>, %arg7: memref<1x1x32xf32, #tpu.memory_space<vmem>>, %arg8: memref<1x1x1xf32, #tpu.memory_space<vmem>>) attributes {dimension_semantics = [#tpu.dimension_semantics<parallel>, #tpu.dimension_semantics<arbitrary>], iteration_bounds = array<i64: 2, 2>, scalar_prefetch = 0 : i64, scratch_operands = 0 : i64, tpu.core_type = #tpu.core_type<tc>, window_params = [{transform_indices = @transform_0, window_bounds = array<i64: 32, 32>}, {transform_indices = @transform_1, window_bounds = array<i64: 32, 32>}, {transform_indices = @transform_2, window_bounds = array<i64: 32, 32>}, {transform_indices = @transform_3, window_bounds = array<i64: 32, 32>}, {transform_indices = @transform_4, window_bounds = array<i64: 1, 1, 32>}, {transform_indices = @transform_5, window_bounds = array<i64: 1, 1, 32>}, {transform_indices = @transform_6, window_bounds = array<i64: 1, 1, 1>}]} {
    %c0_i32 = arith.constant 0 : i32
    %0 = arith.cmpi eq, %arg1, %c0_i32 : i32
    %1 = arith.extui %0 : i1 to i32
    %c0_i32_0 = arith.constant 0 : i32
    %2 = arith.cmpi ne, %1, %c0_i32_0 : i32
    scf.if %2 {
      %cst_50 = arith.constant 0.000000e+00 : f32
      %129 = vector.broadcast %cst_50 : f32 to vector<1x1x32xf32>
      %c0_51 = arith.constant 0 : index
      %c0_52 = arith.constant 0 : index
      %c0_53 = arith.constant 0 : index
      %130 = vector.load %arg6[%c0_51, %c0_52, %c0_53] : memref<1x1x32xf32, #tpu.memory_space<vmem>>, vector<1x1x32xf32>
      tpu.vector_store %arg6[%c0_51, %c0_52, %c0_53], %129 {strides = array<i32>} : memref<1x1x32xf32, #tpu.memory_space<vmem>>, vector<1x1x32xf32>,
      %cst_54 = arith.constant 0.000000e+00 : f32
      %131 = vector.broadcast %cst_54 : f32 to vector<1x1x32xf32>
      %c0_55 = arith.constant 0 : index
      %c0_56 = arith.constant 0 : index
      %c0_57 = arith.constant 0 : index
      %132 = vector.load %arg7[%c0_55, %c0_56, %c0_57] : memref<1x1x32xf32, #tpu.memory_space<vmem>>, vector<1x1x32xf32>
      tpu.vector_store %arg7[%c0_55, %c0_56, %c0_57], %131 {strides = array<i32>} : memref<1x1x32xf32, #tpu.memory_space<vmem>>, vector<1x1x32xf32>,
      %cst_58 = arith.constant 0.000000e+00 : f32
      %133 = vector.broadcast %cst_58 : f32 to vector<1x1x1xf32>
      %c0_59 = arith.constant 0 : index
      %c0_60 = arith.constant 0 : index
      %c0_61 = arith.constant 0 : index
      %134 = vector.load %arg8[%c0_59, %c0_60, %c0_61] : memref<1x1x1xf32, #tpu.memory_space<vmem>>, vector<1x1x1xf32>
      tpu.vector_store %arg8[%c0_59, %c0_60, %c0_61], %133 {strides = array<i32>} : memref<1x1x1xf32, #tpu.memory_space<vmem>>, vector<1x1x1xf32>,
    } else {
    }
    %c0 = arith.constant 0 : index
    %c0_1 = arith.constant 0 : index
    %3 = vector.load %arg2[%c0, %c0_1] : memref<32x32xf32, #tpu.memory_space<vmem>>, vector<32x32xf32>
    %c0_2 = arith.constant 0 : index
    %c0_3 = arith.constant 0 : index
    %4 = vector.load %arg3[%c0_2, %c0_3] : memref<32x32xf32, #tpu.memory_space<vmem>>, vector<32x32xf32>
    %5 = arith.subf %3, %4 : vector<32x32xf32>
    %c0_4 = arith.constant 0 : index
    %c0_5 = arith.constant 0 : index
    %6 = vector.load %arg4[%c0_4, %c0_5] : memref<32x32xf32, #tpu.memory_space<vmem>>, vector<32x32xf32>
    %c0_6 = arith.constant 0 : index
    %c0_7 = arith.constant 0 : index
    %7 = vector.load %arg5[%c0_6, %c0_7] : memref<32x32xf32, #tpu.memory_space<vmem>>, vector<32x32xf32>
    %8 = arith.subf %6, %7 : vector<32x32xf32>
    %c2_i32 = arith.constant 2 : i32
    %9 = arith.muli %arg0, %c2_i32 : i32
    %10 = arith.addi %9, %arg1 : i32
    %11 = tpu.iota {dimensions = array<i32: 0>} : vector<32x1xi32>
    %c32_i32 = arith.constant 32 : i32
    %12 = arith.muli %10, %c32_i32 : i32
    %13 = vector.broadcast %12 : i32 to vector<32x1xi32>
    %14 = arith.addi %11, %13 : vector<32x1xi32>
    %c90_i32 = arith.constant 90 : i32
    %15 = vector.broadcast %c90_i32 : i32 to vector<32x1xi32>
    %16 = arith.cmpi slt, %14, %15 : vector<32x1xi32>
    %17 = arith.mulf %5, %5 : vector<32x32xf32>
    %cst = arith.constant dense<0.000000e+00> : vector<32xf32>
    %18 = vector.multi_reduction <add>, %17, %cst [1] : vector<32x32xf32> to vector<32xf32>
    %19 = vector.shape_cast %18 : vector<32xf32> to vector<32x1xf32>
    %20 = arith.mulf %8, %8 : vector<32x32xf32>
    %cst_8 = arith.constant dense<0.000000e+00> : vector<32xf32>
    %21 = vector.multi_reduction <add>, %20, %cst_8 [1] : vector<32x32xf32> to vector<32xf32>
    %22 = vector.shape_cast %21 : vector<32xf32> to vector<32x1xf32>
    %23 = arith.mulf %5, %8 : vector<32x32xf32>
    %cst_9 = arith.constant dense<0.000000e+00> : vector<32xf32>
    %24 = vector.multi_reduction <add>, %23, %cst_9 [1] : vector<32x32xf32> to vector<32xf32>
    %25 = vector.shape_cast %24 : vector<32xf32> to vector<32x1xf32>
    %cst_10 = arith.constant dense<0.000000e+00> : vector<32xf32>
    %26 = vector.multi_reduction <add>, %5, %cst_10 [1] : vector<32x32xf32> to vector<32xf32>
    %27 = vector.shape_cast %26 : vector<32xf32> to vector<32x1xf32>
    %cst_11 = arith.constant dense<0.000000e+00> : vector<32xf32>
    %28 = vector.multi_reduction <add>, %8, %cst_11 [1] : vector<32x32xf32> to vector<32xf32>
    %29 = vector.shape_cast %28 : vector<32xf32> to vector<32x1xf32>
    %cst_12 = arith.constant 1.000000e-16 : f32
    %30 = vector.broadcast %cst_12 : f32 to vector<32x1xf32>
    %31 = arith.cmpf ogt, %19, %30 : vector<32x1xf32>
    %32 = arith.andi %16, %31 : vector<32x1xi1>
    %cst_13 = arith.constant 1.000000e+00 : f32
    %33 = vector.broadcast %cst_13 : f32 to vector<32x1xf32>
    %34 = arith.select %32, %19, %33 : vector<32x1xi1>, vector<32x1xf32>
    %35 = math.rsqrt %34 : vector<32x1xf32>
    %36 = arith.mulf %35, %35 : vector<32x1xf32>
    %cst_14 = arith.constant 0.000000e+00 : f32
    %37 = vector.broadcast %cst_14 : f32 to vector<32x1xf32>
    %38 = arith.cmpf ogt, %22, %37 : vector<32x1xf32>
    %cst_15 = arith.constant 1.000000e+00 : f32
    %39 = vector.broadcast %cst_15 : f32 to vector<32x1xf32>
    %40 = arith.select %38, %22, %39 : vector<32x1xi1>, vector<32x1xf32>
    %41 = math.rsqrt %40 : vector<32x1xf32>
    %42 = arith.mulf %35, %41 : vector<32x1xf32>
    %43 = arith.mulf %25, %42 : vector<32x1xf32>
    %cst_16 = arith.constant -1.000000e+00 : f32
    %cst_17 = arith.constant 1.000000e+00 : f32
    %44 = vector.broadcast %cst_16 : f32 to vector<32x1xf32>
    %45 = arith.maximumf %44, %43 : vector<32x1xf32>
    %46 = vector.broadcast %cst_17 : f32 to vector<32x1xf32>
    %47 = arith.minimumf %46, %45 : vector<32x1xf32>
    %48 = arith.mulf %47, %47 : vector<32x1xf32>
    %cst_18 = arith.constant 1.000000e+00 : f32
    %49 = vector.broadcast %cst_18 : f32 to vector<32x1xf32>
    %50 = arith.subf %49, %48 : vector<32x1xf32>
    %cst_19 = arith.constant 0.000000e+00 : f32
    %51 = vector.broadcast %cst_19 : f32 to vector<32x1xf32>
    %52 = arith.maximumf %50, %51 : vector<32x1xf32>
    %53 = math.sqrt %52 : vector<32x1xf32>
    %cst_20 = arith.constant 1.000000e+00 : f32
    %54 = vector.broadcast %cst_20 : f32 to vector<32x1xf32>
    %55 = arith.subf %47, %54 : vector<32x1xf32>
    %56 = arith.mulf %25, %36 : vector<32x1xf32>
    %57 = arith.mulf %25, %25 : vector<32x1xf32>
    %58 = arith.mulf %57, %36 : vector<32x1xf32>
    %59 = arith.subf %22, %58 : vector<32x1xf32>
    %cst_21 = arith.constant 0.000000e+00 : f32
    %60 = vector.broadcast %cst_21 : f32 to vector<32x1xf32>
    %61 = arith.maximumf %59, %60 : vector<32x1xf32>
    %cst_22 = arith.constant 0.000000e+00 : f32
    %62 = vector.broadcast %cst_22 : f32 to vector<32x1xf32>
    %63 = arith.cmpf ogt, %61, %62 : vector<32x1xf32>
    %cst_23 = arith.constant 1.000000e+00 : f32
    %64 = vector.broadcast %cst_23 : f32 to vector<32x1xf32>
    %65 = arith.select %63, %61, %64 : vector<32x1xi1>, vector<32x1xf32>
    %66 = math.rsqrt %65 : vector<32x1xf32>
    %67 = arith.mulf %27, %35 : vector<32x1xf32>
    %68 = arith.mulf %56, %27 : vector<32x1xf32>
    %69 = arith.subf %29, %68 : vector<32x1xf32>
    %70 = arith.mulf %69, %66 : vector<32x1xf32>
    %cst_24 = arith.constant 1.000000e+00 : f32
    %71 = vector.broadcast %cst_24 : f32 to vector<32x1xf32>
    %72 = arith.mulf %71, %53 : vector<32x1xf32>
    %cst_25 = arith.constant 1.000000e+00 : f32
    %73 = vector.broadcast %cst_25 : f32 to vector<32x1xf32>
    %74 = arith.mulf %73, %55 : vector<32x1xf32>
    %cst_26 = arith.constant 0.000000e+00 : f32
    %75 = vector.broadcast %cst_26 : f32 to vector<32x1xf32>
    %76 = arith.subf %75, %72 : vector<32x1xf32>
    %77 = arith.mulf %66, %67 : vector<32x1xf32>
    %78 = arith.mulf %77, %56 : vector<32x1xf32>
    %79 = arith.mulf %35, %70 : vector<32x1xf32>
    %80 = arith.addf %78, %79 : vector<32x1xf32>
    %81 = arith.mulf %76, %80 : vector<32x1xf32>
    %82 = arith.mulf %35, %67 : vector<32x1xf32>
    %83 = arith.mulf %66, %70 : vector<32x1xf32>
    %84 = arith.mulf %83, %56 : vector<32x1xf32>
    %85 = arith.subf %82, %84 : vector<32x1xf32>
    %86 = arith.mulf %74, %85 : vector<32x1xf32>
    %87 = arith.addf %81, %86 : vector<32x1xf32>
    %88 = arith.mulf %66, %67 : vector<32x1xf32>
    %89 = arith.mulf %72, %88 : vector<32x1xf32>
    %90 = arith.mulf %66, %70 : vector<32x1xf32>
    %91 = arith.mulf %74, %90 : vector<32x1xf32>
    %92 = arith.addf %89, %91 : vector<32x1xf32>
    %93 = vector.broadcast %87 : vector<32x1xf32> to vector<32x32xf32>
    %94 = arith.mulf %93, %5 : vector<32x32xf32>
    %95 = vector.broadcast %92 : vector<32x1xf32> to vector<32x32xf32>
    %96 = arith.mulf %95, %8 : vector<32x32xf32>
    %97 = arith.addf %94, %96 : vector<32x32xf32>
    %c0_27 = arith.constant 0 : index
    %c0_28 = arith.constant 0 : index
    %c0_29 = arith.constant 0 : index
    %98 = vector.load %arg6[%c0_27, %c0_28, %c0_29] : memref<1x1x32xf32, #tpu.memory_space<vmem>>, vector<1x1x32xf32>
    %99 = arith.mulf %97, %97 : vector<32x32xf32>
    %cst_30 = arith.constant 0.000000e+00 : f32
    %100 = vector.shape_cast %32 : vector<32x1xi1> to vector<32x1xi1>
    %101 = vector.broadcast %100 : vector<32x1xi1> to vector<32x32xi1>
    %102 = vector.broadcast %cst_30 : f32 to vector<32x32xf32>
    %103 = arith.select %101, %99, %102 : vector<32x32xi1>, vector<32x32xf32>
    %cst_31 = arith.constant dense<0.000000e+00> : vector<32xf32>
    %104 = vector.multi_reduction <add>, %103, %cst_31 [0] : vector<32x32xf32> to vector<32xf32>
    %105 = vector.shape_cast %104 : vector<32xf32> to vector<1x32xf32>
    %106 = vector.shape_cast %105 : vector<1x32xf32> to vector<1x1x32xf32>
    %107 = arith.addf %98, %106 : vector<1x1x32xf32>
    %c0_32 = arith.constant 0 : index
    %c0_33 = arith.constant 0 : index
    %c0_34 = arith.constant 0 : index
    %108 = vector.load %arg6[%c0_32, %c0_33, %c0_34] : memref<1x1x32xf32, #tpu.memory_space<vmem>>, vector<1x1x32xf32>
    tpu.vector_store %arg6[%c0_32, %c0_33, %c0_34], %107 {strides = array<i32>} : memref<1x1x32xf32, #tpu.memory_space<vmem>>, vector<1x1x32xf32>,
    %c0_35 = arith.constant 0 : index
    %c0_36 = arith.constant 0 : index
    %c0_37 = arith.constant 0 : index
    %109 = vector.load %arg8[%c0_35, %c0_36, %c0_37] : memref<1x1x1xf32, #tpu.memory_space<vmem>>, vector<1x1x1xf32>
    %110 = arith.extui %32 : vector<32x1xi1> to vector<32x1xi32>
    %111 = arith.sitofp %110 : vector<32x1xi32> to vector<32x1xf32>
    %cst_38 = arith.constant dense<0.000000e+00> : vector<1xf32>
    %112 = vector.multi_reduction <add>, %111, %cst_38 [0] : vector<32x1xf32> to vector<1xf32>
    %113 = vector.shape_cast %112 : vector<1xf32> to vector<1x1xf32>
    %114 = vector.shape_cast %113 : vector<1x1xf32> to vector<1x1x1xf32>
    %115 = arith.addf %109, %114 : vector<1x1x1xf32>
    %c0_39 = arith.constant 0 : index
    %c0_40 = arith.constant 0 : index
    %c0_41 = arith.constant 0 : index
    %116 = vector.load %arg8[%c0_39, %c0_40, %c0_41] : memref<1x1x1xf32, #tpu.memory_space<vmem>>, vector<1x1x1xf32>
    tpu.vector_store %arg8[%c0_39, %c0_40, %c0_41], %115 {strides = array<i32>} : memref<1x1x1xf32, #tpu.memory_space<vmem>>, vector<1x1x1xf32>,
    %117 = arith.subf %5, %8 : vector<32x32xf32>
    %c0_42 = arith.constant 0 : index
    %c0_43 = arith.constant 0 : index
    %c0_44 = arith.constant 0 : index
    %118 = vector.load %arg7[%c0_42, %c0_43, %c0_44] : memref<1x1x32xf32, #tpu.memory_space<vmem>>, vector<1x1x32xf32>
    %119 = arith.mulf %117, %117 : vector<32x32xf32>
    %cst_45 = arith.constant 0.000000e+00 : f32
    %120 = vector.shape_cast %16 : vector<32x1xi1> to vector<32x1xi1>
    %121 = vector.broadcast %120 : vector<32x1xi1> to vector<32x32xi1>
    %122 = vector.broadcast %cst_45 : f32 to vector<32x32xf32>
    %123 = arith.select %121, %119, %122 : vector<32x32xi1>, vector<32x32xf32>
    %cst_46 = arith.constant dense<0.000000e+00> : vector<32xf32>
    %124 = vector.multi_reduction <add>, %123, %cst_46 [0] : vector<32x32xf32> to vector<32xf32>
    %125 = vector.shape_cast %124 : vector<32xf32> to vector<1x32xf32>
    %126 = vector.shape_cast %125 : vector<1x32xf32> to vector<1x1x32xf32>
    %127 = arith.addf %118, %126 : vector<1x1x32xf32>
    %c0_47 = arith.constant 0 : index
    %c0_48 = arith.constant 0 : index
    %c0_49 = arith.constant 0 : index
    %128 = vector.load %arg7[%c0_47, %c0_48, %c0_49] : memref<1x1x32xf32, #tpu.memory_space<vmem>>, vector<1x1x32xf32>
    tpu.vector_store %arg7[%c0_47, %c0_48, %c0_49], %127 {strides = array<i32>} : memref<1x1x32xf32, #tpu.memory_space<vmem>>, vector<1x1x32xf32>,
    return
  }
  func.func @transform_0(%arg0: i32, %arg1: i32) -> (i32, i32) {
    %c2_i32 = arith.constant 2 : i32
    %0 = arith.muli %arg0, %c2_i32 : i32
    %1 = arith.addi %0, %arg1 : i32
    %c2_i32_0 = arith.constant 2 : i32
    %2 = arith.minsi %1, %c2_i32_0 : i32
    %c0_i32 = arith.constant 0 : i32
    %c0_i32_1 = arith.constant 0 : i32
    return %2, %c0_i32 : i32, i32
  }
  func.func @transform_1(%arg0: i32, %arg1: i32) -> (i32, i32) {
    %c2_i32 = arith.constant 2 : i32
    %0 = arith.muli %arg0, %c2_i32 : i32
    %1 = arith.addi %0, %arg1 : i32
    %c2_i32_0 = arith.constant 2 : i32
    %2 = arith.minsi %1, %c2_i32_0 : i32
    %c0_i32 = arith.constant 0 : i32
    %c0_i32_1 = arith.constant 0 : i32
    return %2, %c0_i32 : i32, i32
  }
  func.func @transform_2(%arg0: i32, %arg1: i32) -> (i32, i32) {
    %c2_i32 = arith.constant 2 : i32
    %0 = arith.muli %arg0, %c2_i32 : i32
    %1 = arith.addi %0, %arg1 : i32
    %c2_i32_0 = arith.constant 2 : i32
    %2 = arith.minsi %1, %c2_i32_0 : i32
    %c0_i32 = arith.constant 0 : i32
    %c0_i32_1 = arith.constant 0 : i32
    return %2, %c0_i32 : i32, i32
  }
  func.func @transform_3(%arg0: i32, %arg1: i32) -> (i32, i32) {
    %c2_i32 = arith.constant 2 : i32
    %0 = arith.muli %arg0, %c2_i32 : i32
    %1 = arith.addi %0, %arg1 : i32
    %c2_i32_0 = arith.constant 2 : i32
    %2 = arith.minsi %1, %c2_i32_0 : i32
    %c0_i32 = arith.constant 0 : i32
    %c0_i32_1 = arith.constant 0 : i32
    return %2, %c0_i32 : i32, i32
  }
  func.func @transform_4(%arg0: i32, %arg1: i32) -> (i32, i32, i32) {
    %c0_i32 = arith.constant 0 : i32
    %c0_i32_0 = arith.constant 0 : i32
    %c0_i32_1 = arith.constant 0 : i32
    return %arg0, %c0_i32, %c0_i32_0 : i32, i32, i32
  }
  func.func @transform_5(%arg0: i32, %arg1: i32) -> (i32, i32, i32) {
    %c0_i32 = arith.constant 0 : i32
    %c0_i32_0 = arith.constant 0 : i32
    %c0_i32_1 = arith.constant 0 : i32
    return %arg0, %c0_i32, %c0_i32_0 : i32, i32, i32
  }
  func.func @transform_6(%arg0: i32, %arg1: i32) -> (i32, i32, i32) {
    %c0_i32 = arith.constant 0 : i32
    %c0_i32_0 = arith.constant 0 : i32
    %c0_i32_1 = arith.constant 0 : i32
    return %arg0, %c0_i32, %c0_i32_0 : i32, i32, i32
  }
}

</mosaic_0001>

<llo_original>
// kernel: tpu_custom_call.1
$region0: #{tpu_custom_call.1}
  #allocation0 [shape = 'u32[]', space=smem, size = 0x4, offset = 0x4, fixed_abs, tag = 'smem constant byte address 0x4 - core index']
  #allocation1 [shape = 'u32[144,128]{1,0:T(1,128)}', space=vmem, size = 0x12000, scoped, tag = 'internal scratch']
  %s0 = inlined_call_operand.vmem [shape: f32[90,32], index: 0, kind: input, shape index: {}]
  %s1 = inlined_call_operand.vmem [shape: f32[90,32], index: 1, kind: input, shape index: {}]
  %s2 = inlined_call_operand.vmem [shape: f32[90,32], index: 2, kind: input, shape index: {}]
  %s3 = inlined_call_operand.vmem [shape: f32[90,32], index: 3, kind: input, shape index: {}]
  %s4 = inlined_call_operand.hbm [shape: f32[2,1,32], index: 4, kind: output, shape index: {0}]
  %s5 = inlined_call_operand.hbm [shape: f32[2,1,32], index: 5, kind: output, shape index: {1}]
  %s6 = inlined_call_operand.vmem [shape: f32[2,1,1], index: 6, kind: output, shape index: {2}]
  %7 = xla_tuple %s4, %s5, %s6
  %s8 = sld [smem:[#allocation0]]
  $region69: #{tpu_custom_call.1} parent=0
    _
  %s10 = ssub.s32 1, %s8
  %s11 = scalar_select 0, %s10, %s8
  $region1: #{tpu_custom_call.1} parent=0
    #allocation2 [shape = 'u8[1024]{0}', space=vmem, size = 0x400, scoped, tag = 'output window, operand 0']
    #allocation3 [shape = 's32[2]{0}', space=sflag, size = 0x8, scoped, tag = 'scoped memory for tpu_custom_call.1']
    #allocation4 [shape = 'u8[1024]{0}', space=vmem, size = 0x400, scoped, tag = 'output window, operand 1']
    #allocation5 [shape = 's32[2]{0}', space=sflag, size = 0x8, scoped, tag = 'scoped memory for tpu_custom_call.1']
    %12 = vsyncpa [#allocation3], 0
    %s13 = scalar_lea.sflag [#allocation3], 1
    %14 = vsyncpa %s13, 0
    %15 = vsyncpa [#allocation5], 0
    %s16 = scalar_lea.sflag [#allocation5], 1
    %17 = vsyncpa %s16, 0
    loop: start=0, step=1, limit=6
    $region2: #{tpu_custom_call.1} parent=1 // loop_pre_header
      _
    $region3: #{tpu_custom_call.1} parent=1 // loop_header
      %s19 = sphi 0, %s23
      %p20 = scmp.ge.s32.totalorder %s19, 6
      %s26 = sphi 0, %s38
      %s27 = sphi 0, %s34
      %s28 = sphi 0, %s26
      %s29 = sphi 0, %s27
      %s30 = sphi 0, %s28
      %s31 = sphi 0, %s29
      %s49 = sphi 0, %s51
      %s52 = sphi 0, %s49
      %s53 = sphi 0, %s52
      %s69 = sphi 0, %s53
      %s83 = sphi 0, %s85
      %s86 = sphi 0, %s83
      %s87 = sphi 0, %s86
      %s103 = sphi 0, %s87
      %s117 = sphi 0, %s119
      %s120 = sphi 0, %s117
      %s121 = sphi 0, %s120
      %s137 = sphi 0, %s121
      %s151 = sphi 0, %s153
      %s154 = sphi 0, %s151
      %s155 = sphi 0, %s154
      %s171 = sphi 0, %s155
      %s177 = sphi 0, %s179
      %s180 = sphi 0, %s177
      %s181 = sphi 0, %s180
      %s197 = sphi 0, %s181
      %s203 = sphi 0, %s205
      %s206 = sphi 0, %s203
      %s207 = sphi 0, %s206
      %s223 = sphi 0, %s207
      %s229 = sphi 0, %s231
      %s232 = sphi 0, %s229
      %s233 = sphi 0, %s232
      %s249 = sphi 0, %s233
    $region4: #{tpu_custom_call.1} parent=1 // loop_header_branch
      %22 = sbr.rel (%p20) target = $region8
    $region5: #{tpu_custom_call.1} parent=1 // loop_body
      %s24 = ssub.s32 %s19, 1
      %s25 = ssub.s32 %s19, 2
      %s32 = sadd.s32 1, %s27
      %p33 = scmp.ge.s32.totalorder %s32, 2
      %s34 = scalar_select %p33, 0, %s32
      %s35 = sadd.s32 1, %s26
      %s36 = scalar_select %p33, %s35, %s26
      %p37 = scmp.ge.s32.totalorder %s36, 2
      %s38 = scalar_select %p37, 0, %s36
      %s39 = smul.u32 %s26, 2
      %s40 = sadd.s32 %s39, %s27
      %p41 = scmp.lt.s32.totalorder %s40, 2
      %s42 = scalar_select %p41, %s40, 2
      %s43 = smul.u32 %s38, 2
      %s44 = sadd.s32 %s43, %s34
      %p45 = scmp.lt.s32.totalorder %s44, 2
      %s46 = scalar_select %p45, %s44, 2
      %s47 = ssub.s32 %s42, %s46
      %p48 = scmp.eq.s32.totalorder %s47, 0
      %s50 = sadd.s32 %s49, 1
      %s51 = scalar_select %p48, %s49, %s50
      %p54 = pneg %p48
      %p55 = scmp.eq.s32.totalorder %s19, 3
      %p56 = por %p54, %p55
      %p57 = scmp.ne.s32.totalorder %s49, %s52
      %p58 = scmp.eq.s32.totalorder %s19, 0
      %p59 = por %p57, %p58
      %p60 = scmp.ne.s32.totalorder %s49, %s52
      %p61 = scmp.eq.s32.totalorder %s24, 3
      %p62 = por %p60, %p61
      %p63 = scmp.ne.s32.totalorder %s52, %s53
      %p64 = scmp.eq.s32.totalorder %s24, 0
      %p65 = por %p63, %p64
      %p66 = scmp.ne.s32.totalorder %s52, %s53
      %p67 = scmp.eq.s32.totalorder %s25, 3
      %p68 = por %p66, %p67
      %p70 = scmp.ne.s32.totalorder %s53, %s69
      %p71 = scmp.eq.s32.totalorder %s25, 0
      %p72 = por %p70, %p71
      %s73 = smul.u32 %s26, 2
      %s74 = sadd.s32 %s73, %s27
      %p75 = scmp.lt.s32.totalorder %s74, 2
      %s76 = scalar_select %p75, %s74, 2
      %s77 = smul.u32 %s38, 2
      %s78 = sadd.s32 %s77, %s34
      %p79 = scmp.lt.s32.totalorder %s78, 2
      %s80 = scalar_select %p79, %s78, 2
      %s81 = ssub.s32 %s76, %s80
      %p82 = scmp.eq.s32.totalorder %s81, 0
      %s84 = sadd.s32 %s83, 1
      %s85 = scalar_select %p82, %s83, %s84
      %p88 = pneg %p82
      %p89 = scmp.eq.s32.totalorder %s19, 3
      %p90 = por %p88, %p89
      %p91 = scmp.ne.s32.totalorder %s83, %s86
      %p92 = scmp.eq.s32.totalorder %s19, 0
      %p93 = por %p91, %p92
      %p94 = scmp.ne.s32.totalorder %s83, %s86
      %p95 = scmp.eq.s32.totalorder %s24, 3
      %p96 = por %p94, %p95
      %p97 = scmp.ne.s32.totalorder %s86, %s87
      %p98 = scmp.eq.s32.totalorder %s24, 0
      %p99 = por %p97, %p98
      %p100 = scmp.ne.s32.totalorder %s86, %s87
      %p101 = scmp.eq.s32.totalorder %s25, 3
      %p102 = por %p100, %p101
      %p104 = scmp.ne.s32.totalorder %s87, %s103
      %p105 = scmp.eq.s32.totalorder %s25, 0
      %p106 = por %p104, %p105
      %s107 = smul.u32 %s26, 2
      %s108 = sadd.s32 %s107, %s27
      %p109 = scmp.lt.s32.totalorder %s108, 2
      %s110 = scalar_select %p109, %s108, 2
      %s111 = smul.u32 %s38, 2
      %s112 = sadd.s32 %s111, %s34
      %p113 = scmp.lt.s32.totalorder %s112, 2
      %s114 = scalar_select %p113, %s112, 2
      %s115 = ssub.s32 %s110, %s114
      %p116 = scmp.eq.s32.totalorder %s115, 0
      %s118 = sadd.s32 %s117, 1
      %s119 = scalar_select %p116, %s117, %s118
      %p122 = pneg %p116
      %p123 = scmp.eq.s32.totalorder %s19, 3
      %p124 = por %p122, %p123
      %p125 = scmp.ne.s32.totalorder %s117, %s120
      %p126 = scmp.eq.s32.totalorder %s19, 0
      %p127 = por %p125, %p126
      %p128 = scmp.ne.s32.totalorder %s117, %s120
      %p129 = scmp.eq.s32.totalorder %s24, 3
      %p130 = por %p128, %p129
      %p131 = scmp.ne.s32.totalorder %s120, %s121
      %p132 = scmp.eq.s32.totalorder %s24, 0
      %p133 = por %p131, %p132
      %p134 = scmp.ne.s32.totalorder %s120, %s121
      %p135 = scmp.eq.s32.totalorder %s25, 3
      %p136 = por %p134, %p135
      %p138 = scmp.ne.s32.totalorder %s121, %s137
      %p139 = scmp.eq.s32.totalorder %s25, 0
      %p140 = por %p138, %p139
      %s141 = smul.u32 %s26, 2
      %s142 = sadd.s32 %s141, %s27
      %p143 = scmp.lt.s32.totalorder %s142, 2
      %s144 = scalar_select %p143, %s142, 2
      %s145 = smul.u32 %s38, 2
      %s146 = sadd.s32 %s145, %s34
      %p147 = scmp.lt.s32.totalorder %s146, 2
      %s148 = scalar_select %p147, %s146, 2
      %s149 = ssub.s32 %s144, %s148
      %p150 = scmp.eq.s32.totalorder %s149, 0
      %s152 = sadd.s32 %s151, 1
      %s153 = scalar_select %p150, %s151, %s152
      %p156 = pneg %p150
      %p157 = scmp.eq.s32.totalorder %s19, 3
      %p158 = por %p156, %p157
      %p159 = scmp.ne.s32.totalorder %s151, %s154
      %p160 = scmp.eq.s32.totalorder %s19, 0
      %p161 = por %p159, %p160
      %p162 = scmp.ne.s32.totalorder %s151, %s154
      %p163 = scmp.eq.s32.totalorder %s24, 3
      %p164 = por %p162, %p163
      %p165 = scmp.ne.s32.totalorder %s154, %s155
      %p166 = scmp.eq.s32.totalorder %s24, 0
      %p167 = por %p165, %p166
      %p168 = scmp.ne.s32.totalorder %s154, %s155
      %p169 = scmp.eq.s32.totalorder %s25, 3
      %p170 = por %p168, %p169
      %p172 = scmp.ne.s32.totalorder %s155, %s171
      %p173 = scmp.eq.s32.totalorder %s25, 0
      %p174 = por %p172, %p173
      %s175 = ssub.s32 %s26, %s38
      %p176 = scmp.eq.s32.totalorder %s175, 0
      %s178 = sadd.s32 %s177, 1
      %s179 = scalar_select %p176, %s177, %s178
      %p182 = pneg %p176
      %p183 = scmp.eq.s32.totalorder %s19, 3
      %p184 = por %p182, %p183
      %p185 = scmp.ne.s32.totalorder %s177, %s180
      %p186 = scmp.eq.s32.totalorder %s19, 0
      %p187 = por %p185, %p186
      %p188 = scmp.ne.s32.totalorder %s177, %s180
      %p189 = scmp.eq.s32.totalorder %s24, 3
      %p190 = por %p188, %p189
      %p191 = scmp.ne.s32.totalorder %s180, %s181
      %p192 = scmp.eq.s32.totalorder %s24, 0
      %p193 = por %p191, %p192
      %p194 = scmp.ne.s32.totalorder %s180, %s181
      %p195 = scmp.eq.s32.totalorder %s25, 3
      %p196 = por %p194, %p195
      %p198 = scmp.ne.s32.totalorder %s181, %s197
      %p199 = scmp.eq.s32.totalorder %s25, 0
      %p200 = por %p198, %p199
      %s201 = ssub.s32 %s26, %s38
      %p202 = scmp.eq.s32.totalorder %s201, 0
      %s204 = sadd.s32 %s203, 1
      %s205 = scalar_select %p202, %s203, %s204
      %p208 = pneg %p202
      %p209 = scmp.eq.s32.totalorder %s19, 3
      %p210 = por %p208, %p209
      %p211 = scmp.ne.s32.totalorder %s203, %s206
      %p212 = scmp.eq.s32.totalorder %s19, 0
      %p213 = por %p211, %p212
      %p214 = scmp.ne.s32.totalorder %s203, %s206
      %p215 = scmp.eq.s32.totalorder %s24, 3
      %p216 = por %p214, %p215
      %p217 = scmp.ne.s32.totalorder %s206, %s207
      %p218 = scmp.eq.s32.totalorder %s24, 0
      %p219 = por %p217, %p218
      %p220 = scmp.ne.s32.totalorder %s206, %s207
      %p221 = scmp.eq.s32.totalorder %s25, 3
      %p222 = por %p220, %p221
      %p224 = scmp.ne.s32.totalorder %s207, %s223
      %p225 = scmp.eq.s32.totalorder %s25, 0
      %p226 = por %p224, %p225
      %s227 = ssub.s32 %s26, %s38
      %p228 = scmp.eq.s32.totalorder %s227, 0
      %s230 = sadd.s32 %s229, 1
      %s231 = scalar_select %p228, %s229, %s230
      %p234 = pneg %p228
      %p235 = scmp.eq.s32.totalorder %s19, 3
      %p236 = por %p234, %p235
      %p237 = scmp.ne.s32.totalorder %s229, %s232
      %p238 = scmp.eq.s32.totalorder %s19, 0
      %p239 = por %p237, %p238
      %p240 = scmp.ne.s32.totalorder %s229, %s232
      %p241 = scmp.eq.s32.totalorder %s24, 3
      %p242 = por %p240, %p241
      %p243 = scmp.ne.s32.totalorder %s232, %s233
      %p244 = scmp.eq.s32.totalorder %s24, 0
      %p245 = por %p243, %p244
      %p246 = scmp.ne.s32.totalorder %s232, %s233
      %p247 = scmp.eq.s32.totalorder %s25, 3
      %p248 = por %p246, %p247
      %p250 = scmp.ne.s32.totalorder %s233, %s249
      %p251 = scmp.eq.s32.totalorder %s25, 0
      %p252 = por %p250, %p251
      %p253 = scmp.le.s32.totalorder 1, %s19
      %p254 = scmp.lt.s32.totalorder %s19, 5
      %p255 = pnand %p253, %p254
      %p256 = pneg %p255
      // Predicated region
      $region9: #{tpu_custom_call.1} parent=5 // pred_check
        _
      $region10: #{tpu_custom_call.1} parent=5 // pred_check_branch
        %258 = sbr.rel (%p255) target = $region12
      $region11: #{tpu_custom_call.1} parent=5 // pred_region
        %s259 = ssub.s32 %s19, 1
      $region12: #{tpu_custom_call.1} parent=5 // pred_fallthru
        _
      %p260 = scmp.lt.s32.totalorder %s19, 4
      // Predicated region
      $region13: #{tpu_custom_call.1} parent=5 // pred_check
        %p261 = pneg %p260
      $region14: #{tpu_custom_call.1} parent=5 // pred_check_branch
        %263 = sbr.rel (%p261) target = $region16
      $region15: #{tpu_custom_call.1} parent=5 // pred_region
        // Predicated region
        $region17: #{tpu_custom_call.1} parent=15 // pred_check
          %p264 = pneg %p59
        $region18: #{tpu_custom_call.1} parent=15 // pred_check_branch
          %266 = sbr.rel (%p264) target = $region20
        $region19: #{tpu_custom_call.1} parent=15 // pred_region
          %s267 = smul.u32 %s26, 2
          %s268 = sadd.s32 %s267, %s27
          %p269 = scmp.lt.s32.totalorder %s268, 2
          %s270 = scalar_select %p269, %s268, 2
          %s271 = smul.u32 4, %s270
          %p272 = scmp.lt.s32.totalorder %s271, 11
          %s273 = scalar_select %p272, %s271, 11
          %s274 = smul.addr %s273, 8
          %s275 = scalar_lea.vmem %s0, %s274
          %s276 = smul.u32 %s26, 2
          %s277 = sadd.s32 %s276, %s27
          %p278 = scmp.lt.s32.totalorder %s277, 2
          %s279 = scalar_select %p278, %s277, 2
          %s280 = smul.u32 4, %s279
        $region20: #{tpu_custom_call.1} parent=15 // pred_fallthru
          _
        // Predicated region
        $region21: #{tpu_custom_call.1} parent=15 // pred_check
          %p281 = pneg %p93
        $region22: #{tpu_custom_call.1} parent=15 // pred_check_branch
          %283 = sbr.rel (%p281) target = $region24
        $region23: #{tpu_custom_call.1} parent=15 // pred_region
          %s284 = smul.u32 %s26, 2
          %s285 = sadd.s32 %s284, %s27
          %p286 = scmp.lt.s32.totalorder %s285, 2
          %s287 = scalar_select %p286, %s285, 2
          %s288 = smul.u32 4, %s287
          %p289 = scmp.lt.s32.totalorder %s288, 11
          %s290 = scalar_select %p289, %s288, 11
          %s291 = smul.addr %s290, 8
          %s292 = scalar_lea.vmem %s1, %s291
          %s293 = smul.u32 %s26, 2
          %s294 = sadd.s32 %s293, %s27
          %p295 = scmp.lt.s32.totalorder %s294, 2
          %s296 = scalar_select %p295, %s294, 2
          %s297 = smul.u32 4, %s296
        $region24: #{tpu_custom_call.1} parent=15 // pred_fallthru
          _
        // Predicated region
        $region25: #{tpu_custom_call.1} parent=15 // pred_check
          %p298 = pneg %p127
        $region26: #{tpu_custom_call.1} parent=15 // pred_check_branch
          %300 = sbr.rel (%p298) target = $region28
        $region27: #{tpu_custom_call.1} parent=15 // pred_region
          %s301 = smul.u32 %s26, 2
          %s302 = sadd.s32 %s301, %s27
          %p303 = scmp.lt.s32.totalorder %s302, 2
          %s304 = scalar_select %p303, %s302, 2
          %s305 = smul.u32 4, %s304
          %p306 = scmp.lt.s32.totalorder %s305, 11
          %s307 = scalar_select %p306, %s305, 11
          %s308 = smul.addr %s307, 8
          %s309 = scalar_lea.vmem %s2, %s308
          %s310 = smul.u32 %s26, 2
          %s311 = sadd.s32 %s310, %s27
          %p312 = scmp.lt.s32.totalorder %s311, 2
          %s313 = scalar_select %p312, %s311, 2
          %s314 = smul.u32 4, %s313
        $region28: #{tpu_custom_call.1} parent=15 // pred_fallthru
          _
        // Predicated region
        $region29: #{tpu_custom_call.1} parent=15 // pred_check
          %p315 = pneg %p161
        $region30: #{tpu_custom_call.1} parent=15 // pred_check_branch
          %317 = sbr.rel (%p315) target = $region32
        $region31: #{tpu_custom_call.1} parent=15 // pred_region
          %s318 = smul.u32 %s26, 2
          %s319 = sadd.s32 %s318, %s27
          %p320 = scmp.lt.s32.totalorder %s319, 2
          %s321 = scalar_select %p320, %s319, 2
          %s322 = smul.u32 4, %s321
          %p323 = scmp.lt.s32.totalorder %s322, 11
          %s324 = scalar_select %p323, %s322, 11
          %s325 = smul.addr %s324, 8
          %s326 = scalar_lea.vmem %s3, %s325
          %s327 = smul.u32 %s26, 2
          %s328 = sadd.s32 %s327, %s27
          %p329 = scmp.lt.s32.totalorder %s328, 2
          %s330 = scalar_select %p329, %s328, 2
          %s331 = smul.u32 4, %s330
        $region32: #{tpu_custom_call.1} parent=15 // pred_fallthru
          _
      $region16: #{tpu_custom_call.1} parent=5 // pred_fallthru
        _
      %p332 = scmp.le.s32.totalorder 1, %s19
      %p333 = scmp.lt.s32.totalorder %s19, 5
      %p334 = pnand %p332, %p333
      %p335 = pneg %p334
      // Predicated region
      $region33: #{tpu_custom_call.1} parent=5 // pred_check
        _
      $region34: #{tpu_custom_call.1} parent=5 // pred_check_branch
        %337 = sbr.rel (%p334) target = $region36
      $region35: #{tpu_custom_call.1} parent=5 // pred_region
        %s338 = ssub.s32 %s19, 1
        %s339 = smul.u32 %s28, 2
        %s340 = sadd.s32 %s339, %s29
        %p341 = scmp.lt.s32.totalorder %s340, 2
        %s342 = scalar_select %p341, %s340, 2
        %s343 = smul.u32 4, %s342
        %p344 = scmp.lt.s32.totalorder %s343, 11
        %s345 = scalar_select %p344, %s343, 11
        %s346 = smul.addr %s345, 8
        %s347 = scalar_lea.vmem %s0, %s346
        %p348 = pneg %p65
        %p349 = pneg %p62
        %s350 = smul.u32 %s28, 2
        %s351 = sadd.s32 %s350, %s29
        %p352 = scmp.lt.s32.totalorder %s351, 2
        %s353 = scalar_select %p352, %s351, 2
        %s354 = smul.u32 4, %s353
        %p355 = scmp.lt.s32.totalorder %s354, 11
        %s356 = scalar_select %p355, %s354, 11
        %s357 = smul.addr %s356, 8
        %s358 = scalar_lea.vmem %s1, %s357
        %p359 = pneg %p99
        %p360 = pneg %p96
        %s361 = smul.u32 %s28, 2
        %s362 = sadd.s32 %s361, %s29
        %p363 = scmp.lt.s32.totalorder %s362, 2
        %s364 = scalar_select %p363, %s362, 2
        %s365 = smul.u32 4, %s364
        %p366 = scmp.lt.s32.totalorder %s365, 11
        %s367 = scalar_select %p366, %s365, 11
        %s368 = smul.addr %s367, 8
        %s369 = scalar_lea.vmem %s2, %s368
        %p370 = pneg %p133
        %p371 = pneg %p130
        %s372 = smul.u32 %s28, 2
        %s373 = sadd.s32 %s372, %s29
        %p374 = scmp.lt.s32.totalorder %s373, 2
        %s375 = scalar_select %p374, %s373, 2
        %s376 = smul.u32 4, %s375
        %p377 = scmp.lt.s32.totalorder %s376, 11
        %s378 = scalar_select %p377, %s376, 11
        %s379 = smul.addr %s378, 8
        %s380 = scalar_lea.vmem %s3, %s379
        %p381 = pneg %p167
        %p382 = pneg %p164
        %p383 = pneg %p193
        %p384 = pneg %p190
        %s385 = sand.u32 %s180, 1
        %s386 = scalar_lea.sflag [#allocation3], %s385
        %s387 = sand.u32 %s180, 1
        %s388 = scalar_lea.vmem [#allocation2], %s387
        %p389 = pneg %p219
        %p390 = pneg %p216
        %s391 = sand.u32 %s206, 1
        %s392 = scalar_lea.sflag [#allocation5], %s391
        %s393 = sand.u32 %s206, 1
        %s394 = scalar_lea.vmem [#allocation4], %s393
        %p395 = pneg %p245
        %p396 = pneg %p242
        %p397 = scmp.lt.s32.totalorder %s28, 1
        %s398 = scalar_select %p397, %s28, 1
        %s399 = scalar_lea.vmem %s6, %s398
        %s400 = smul.u32 %s28, 2
        %s401 = sadd.s32 %s400, %s29
        %p402 = scmp.lt.s32.totalorder %s401, 2
        %s403 = scalar_select %p402, %s401, 2
        %s404 = smul.u32 4, %s403
        %p405 = scmp.lt.s32.totalorder %s404, 11
        %s406 = scalar_select %p405, %s404, 11
        %s407 = smul.addr %s406, 8
        %s408 = scalar_lea.vmem %s0, %s407
        %s409 = smul.u32 %s28, 2
        %s410 = sadd.s32 %s409, %s29
        %p411 = scmp.lt.s32.totalorder %s410, 2
        %s412 = scalar_select %p411, %s410, 2
        %s413 = smul.u32 4, %s412
        %s414 = smul.u32 %s28, 2
        %s415 = sadd.s32 %s414, %s29
        %p416 = scmp.lt.s32.totalorder %s415, 2
        %s417 = scalar_select %p416, %s415, 2
        %s418 = smul.u32 4, %s417
        %p419 = scmp.lt.s32.totalorder %s418, 11
        %s420 = scalar_select %p419, %s418, 11
        %s421 = smul.addr %s420, 8
        %s422 = scalar_lea.vmem %s1, %s421
        %s423 = smul.u32 %s28, 2
        %s424 = sadd.s32 %s423, %s29
        %p425 = scmp.lt.s32.totalorder %s424, 2
        %s426 = scalar_select %p425, %s424, 2
        %s427 = smul.u32 4, %s426
        %s428 = smul.u32 %s28, 2
        %s429 = sadd.s32 %s428, %s29
        %p430 = scmp.lt.s32.totalorder %s429, 2
        %s431 = scalar_select %p430, %s429, 2
        %s432 = smul.u32 4, %s431
        %p433 = scmp.lt.s32.totalorder %s432, 11
        %s434 = scalar_select %p433, %s432, 11
        %s435 = smul.addr %s434, 8
        %s436 = scalar_lea.vmem %s2, %s435
        %s437 = smul.u32 %s28, 2
        %s438 = sadd.s32 %s437, %s29
        %p439 = scmp.lt.s32.totalorder %s438, 2
        %s440 = scalar_select %p439, %s438, 2
        %s441 = smul.u32 4, %s440
        %s442 = smul.u32 %s28, 2
        %s443 = sadd.s32 %s442, %s29
        %p444 = scmp.lt.s32.totalorder %s443, 2
        %s445 = scalar_select %p444, %s443, 2
        %s446 = smul.u32 4, %s445
        %p447 = scmp.lt.s32.totalorder %s446, 11
        %s448 = scalar_select %p447, %s446, 11
        %s449 = smul.addr %s448, 8
        %s450 = scalar_lea.vmem %s3, %s449
        %s451 = smul.u32 %s28, 2
        %s452 = sadd.s32 %s451, %s29
        %p453 = scmp.lt.s32.totalorder %s452, 2
        %s454 = scalar_select %p453, %s452, 2
        %s455 = smul.u32 4, %s454
        %p456 = scmp.lt.s32.totalorder %s28, 1
        %s457 = scalar_select %p456, %s28, 1
        %s458 = scalar_lea.vmem %s6, %s457
        %p459 = scmp.eq.s32.totalorder %s29, 0
        // Predicated region
        $region37: #{tpu_custom_call.1} parent=35 // pred_check
          %p460 = pneg %p459
        $region38: #{tpu_custom_call.1} parent=35 // pred_check_branch
          %462 = sbr.rel (%p460) target = $region40
        $region39: #{tpu_custom_call.1} parent=35 // pred_region
          %vm463 = vcmask 253952
          %464 = vst.msk [vmem:[%s388] sm:$0x1] %vm463, 0.0
          %465 = vst.msk [vmem:[%s394] sm:$0x1] %vm463, 0.0
          %vm466 = vcmask 0
          %467 = vst.msk [vmem:[%s458] sm:$0x1] %vm466, 0.0
        $region40: #{tpu_custom_call.1} parent=35 // pred_fallthru
          _
        %v468 = vld [vmem:[%s408] sm:$0xff]
        %v469 = vld [vmem:[%s408 + $0x8] sm:$0xff]
        %v470 = vld [vmem:[%s408 + $0x10] sm:$0xff]
        %v471 = vld [vmem:[%s408 + $0x18] sm:$0xff]
        %v472 = vld [vmem:[%s422] sm:$0xff]
        %v473 = vld [vmem:[%s422 + $0x8] sm:$0xff]
        %v474 = vld [vmem:[%s422 + $0x10] sm:$0xff]
        %v475 = vld [vmem:[%s422 + $0x18] sm:$0xff]
        %v476 = vsub.f32 %v468, %v472
        %v477 = vsub.f32 %v469, %v473
        %v478 = vsub.f32 %v470, %v474
        %v479 = vsub.f32 %v471, %v475
        %v480 = vld [vmem:[%s436] sm:$0xff]
        %v481 = vld [vmem:[%s436 + $0x8] sm:$0xff]
        %v482 = vld [vmem:[%s436 + $0x10] sm:$0xff]
        %v483 = vld [vmem:[%s436 + $0x18] sm:$0xff]
        %v484 = vld [vmem:[%s450] sm:$0xff]
        %v485 = vld [vmem:[%s450 + $0x8] sm:$0xff]
        %v486 = vld [vmem:[%s450 + $0x10] sm:$0xff]
        %v487 = vld [vmem:[%s450 + $0x18] sm:$0xff]
        %v488 = vsub.f32 %v480, %v484
        %v489 = vsub.f32 %v481, %v485
        %v490 = vsub.f32 %v482, %v486
        %v491 = vsub.f32 %v483, %v487
        %s492 = smul.u32 %s28, 2
        %s493 = sadd.s32 %s492, %s29
        %v494 = vlaneseq
        %v495 = vshrl.u32 %v494, 7
        %v496 = vadd.s32 %v495, 8
        %v497 = vadd.s32 %v495, 16
        %v498 = vadd.s32 %v495, 24
        %s499 = smul.u32 %s493, 32
        %v500 = vstv %s499
        %v501 = vadd.s32 %v495, %v500
        %v502 = vadd.s32 %v496, %v500
        %v503 = vadd.s32 %v497, %v500
        %v504 = vadd.s32 %v498, %v500
        %vm505 = vcmp.lt.s32.totalorder %v501, 90
        %vm506 = vcmp.lt.s32.totalorder %v502, 90
        %vm507 = vcmp.lt.s32.totalorder %v503, 90
        %vm508 = vcmp.lt.s32.totalorder %v504, 90
        %v509 = vmul.f32 %v476, %v476
        %v510 = vmul.f32 %v477, %v477
        %v511 = vmul.f32 %v478, %v478
        %v512 = vmul.f32 %v479, %v479
        %vm513 = vcmask 261120
        %v514 = vsel %vm513, %v509, 0.0
        %515 = vadd.xlane.f32.xlu0 %v514
        %v516 = vpop.xlane.xlu0 %515
        %v517 = vsel %vm513, %v510, 0.0
        %518 = vadd.xlane.f32.xlu0 %v517
        %v519 = vpop.xlane.xlu0 %518
        %v520 = vsel %vm513, %v511, 0.0
        %521 = vadd.xlane.f32.xlu0 %v520
        %v522 = vpop.xlane.xlu0 %521
        %v523 = vsel %vm513, %v512, 0.0
        %524 = vadd.xlane.f32.xlu0 %v523
        %v525 = vpop.xlane.xlu0 %524
        %v526 = vmul.f32 %v488, %v488
        %v527 = vmul.f32 %v489, %v489
        %v528 = vmul.f32 %v490, %v490
        %v529 = vmul.f32 %v491, %v491
        %v530 = vsel %vm513, %v526, 0.0
        %531 = vadd.xlane.f32.xlu0 %v530
        %v532 = vpop.xlane.xlu0 %531
        %v533 = vsel %vm513, %v527, 0.0
        %534 = vadd.xlane.f32.xlu0 %v533
        %v535 = vpop.xlane.xlu0 %534
        %v536 = vsel %vm513, %v528, 0.0
        %537 = vadd.xlane.f32.xlu0 %v536
        %v538 = vpop.xlane.xlu0 %537
        %v539 = vsel %vm513, %v529, 0.0
        %540 = vadd.xlane.f32.xlu0 %v539
        %v541 = vpop.xlane.xlu0 %540
        %v542 = vmul.f32 %v476, %v488
        %v543 = vmul.f32 %v477, %v489
        %v544 = vmul.f32 %v478, %v490
        %v545 = vmul.f32 %v479, %v491
        %v546 = vsel %vm513, %v542, 0.0
        %547 = vadd.xlane.f32.xlu0 %v546
        %v548 = vpop.xlane.xlu0 %547
        %v549 = vsel %vm513, %v543, 0.0
        %550 = vadd.xlane.f32.xlu0 %v549
        %v551 = vpop.xlane.xlu0 %550
        %v552 = vsel %vm513, %v544, 0.0
        %553 = vadd.xlane.f32.xlu0 %v552
        %v554 = vpop.xlane.xlu0 %553
        %v555 = vsel %vm513, %v545, 0.0
        %556 = vadd.xlane.f32.xlu0 %v555
        %v557 = vpop.xlane.xlu0 %556
        %v558 = vsel %vm513, %v476, 0.0
        %559 = vadd.xlane.f32.xlu0 %v558
        %v560 = vpop.xlane.xlu0 %559
        %v561 = vsel %vm513, %v477, 0.0
        %562 = vadd.xlane.f32.xlu0 %v561
        %v563 = vpop.xlane.xlu0 %562
        %v564 = vsel %vm513, %v478, 0.0
        %565 = vadd.xlane.f32.xlu0 %v564
        %v566 = vpop.xlane.xlu0 %565
        %v567 = vsel %vm513, %v479, 0.0
        %568 = vadd.xlane.f32.xlu0 %v567
        %v569 = vpop.xlane.xlu0 %568
        %v570 = vsel %vm513, %v488, 0.0
        %571 = vadd.xlane.f32.xlu0 %v570
        %v572 = vpop.xlane.xlu0 %571
        %v573 = vsel %vm513, %v489, 0.0
        %574 = vadd.xlane.f32.xlu0 %v573
        %v575 = vpop.xlane.xlu0 %574
        %v576 = vsel %vm513, %v490, 0.0
        %577 = vadd.xlane.f32.xlu0 %v576
        %v578 = vpop.xlane.xlu0 %577
        %v579 = vsel %vm513, %v491, 0.0
        %580 = vadd.xlane.f32.xlu0 %v579
        %v581 = vpop.xlane.xlu0 %580
        %vm582 = vcmp.gt.f32.partialorder %v516, 1e-16
        %vm583 = vcmp.gt.f32.partialorder %v519, 1e-16
        %vm584 = vcmp.gt.f32.partialorder %v522, 1e-16
        %vm585 = vcmp.gt.f32.partialorder %v525, 1e-16
        %vm586 = vmand %vm505, %vm582
        %vm587 = vmand %vm506, %vm583
        %vm588 = vmand %vm507, %vm584
        %vm589 = vmand %vm508, %vm585
        %v590 = vsel %vm586, %v516, 1.0
        %v591 = vsel %vm587, %v519, 1.0
        %v592 = vsel %vm588, %v522, 1.0
        %v593 = vsel %vm589, %v525, 1.0
        %v594 = vrsqrt.pop %v590
        %v595 = vrsqrt.pop %v591
        %v596 = vrsqrt.pop %v592
        %v597 = vrsqrt.pop %v593
        %v598 = vmul.f32 %v594, %v594
        %v599 = vmul.f32 %v595, %v595
        %v600 = vmul.f32 %v596, %v596
        %v601 = vmul.f32 %v597, %v597
        %vm602 = vcmp.gt.f32.partialorder %v532, 0.0
        %vm603 = vcmp.gt.f32.partialorder %v535, 0.0
        %vm604 = vcmp.gt.f32.partialorder %v538, 0.0
        %vm605 = vcmp.gt.f32.partialorder %v541, 0.0
        %v606 = vsel %vm602, %v532, 1.0
        %v607 = vsel %vm603, %v535, 1.0
        %v608 = vsel %vm604, %v538, 1.0
        %v609 = vsel %vm605, %v541, 1.0
        %v610 = vrsqrt.pop %v606
        %v611 = vrsqrt.pop %v607
        %v612 = vrsqrt.pop %v608
        %v613 = vrsqrt.pop %v609
        %v614 = vmul.f32 %v594, %v610
        %v615 = vmul.f32 %v595, %v611
        %v616 = vmul.f32 %v596, %v612
        %v617 = vmul.f32 %v597, %v613
        %v618 = vmul.f32 %v548, %v614
        %v619 = vmul.f32 %v551, %v615
        %v620 = vmul.f32 %v554, %v616
        %v621 = vmul.f32 %v557, %v617
        %v622 = vmax.f32 %v618, -1.0
        %v623 = vmax.f32 %v619, -1.0
        %v624 = vmax.f32 %v620, -1.0
        %v625 = vmax.f32 %v621, -1.0
        %v626 = vmin.f32 %v622, 1.0
        %v627 = vmin.f32 %v623, 1.0
        %v628 = vmin.f32 %v624, 1.0
        %v629 = vmin.f32 %v625, 1.0
        %v630 = vmul.f32 %v626, %v626
        %v631 = vmul.f32 %v627, %v627
        %v632 = vmul.f32 %v628, %v628
        %v633 = vmul.f32 %v629, %v629
        %v634 = vsub.f32 1.0, %v630
        %v635 = vsub.f32 1.0, %v631
        %v636 = vsub.f32 1.0, %v632
        %v637 = vsub.f32 1.0, %v633
        %v638 = vmax.f32 %v634, 0.0
        %v639 = vmax.f32 %v635, 0.0
        %v640 = vmax.f32 %v636, 0.0
        %v641 = vmax.f32 %v637, 0.0
        %v642 = vrsqrt.pop %v638
        %v643 = vmul.f32 %v638, %v642
        %vm644 = vcmp.eq.f32.partialorder %v638, inf
        %v645 = vsel %vm644, %v638, %v643
        %vm646 = vcmp.eq.f32.partialorder %v638, 0.0
        %v647 = vand.u32 %v638, 2147483648
        %v648 = vsel %vm646, %v647, %v645
        %v649 = vrsqrt.pop %v639
        %v650 = vmul.f32 %v639, %v649
        %vm651 = vcmp.eq.f32.partialorder %v639, inf
        %v652 = vsel %vm651, %v639, %v650
        %vm653 = vcmp.eq.f32.partialorder %v639, 0.0
        %v654 = vand.u32 %v639, 2147483648
        %v655 = vsel %vm653, %v654, %v652
        %v656 = vrsqrt.pop %v640
        %v657 = vmul.f32 %v640, %v656
        %vm658 = vcmp.eq.f32.partialorder %v640, inf
        %v659 = vsel %vm658, %v640, %v657
        %vm660 = vcmp.eq.f32.partialorder %v640, 0.0
        %v661 = vand.u32 %v640, 2147483648
        %v662 = vsel %vm660, %v661, %v659
        %v663 = vrsqrt.pop %v641
        %v664 = vmul.f32 %v641, %v663
        %vm665 = vcmp.eq.f32.partialorder %v641, inf
        %v666 = vsel %vm665, %v641, %v664
        %vm667 = vcmp.eq.f32.partialorder %v641, 0.0
        %v668 = vand.u32 %v641, 2147483648
        %v669 = vsel %vm667, %v668, %v666
        %v670 = vsub.f32 %v626, 1.0
        %v671 = vsub.f32 %v627, 1.0
        %v672 = vsub.f32 %v628, 1.0
        %v673 = vsub.f32 %v629, 1.0
        %v674 = vmul.f32 %v548, %v598
        %v675 = vmul.f32 %v551, %v599
        %v676 = vmul.f32 %v554, %v600
        %v677 = vmul.f32 %v557, %v601
        %v678 = vmul.f32 %v548, %v548
        %v679 = vmul.f32 %v551, %v551
        %v680 = vmul.f32 %v554, %v554
        %v681 = vmul.f32 %v557, %v557
        %v682 = vmul.f32 %v678, %v598
        %v683 = vmul.f32 %v679, %v599
        %v684 = vmul.f32 %v680, %v600
        %v685 = vmul.f32 %v681, %v601
        %v686 = vsub.f32 %v532, %v682
        %v687 = vsub.f32 %v535, %v683
        %v688 = vsub.f32 %v538, %v684
        %v689 = vsub.f32 %v541, %v685
        %v690 = vmax.f32 %v686, 0.0
        %v691 = vmax.f32 %v687, 0.0
        %v692 = vmax.f32 %v688, 0.0
        %v693 = vmax.f32 %v689, 0.0
        %vm694 = vcmp.gt.f32.partialorder %v690, 0.0
        %vm695 = vcmp.gt.f32.partialorder %v691, 0.0
        %vm696 = vcmp.gt.f32.partialorder %v692, 0.0
        %vm697 = vcmp.gt.f32.partialorder %v693, 0.0
        %v698 = vsel %vm694, %v690, 1.0
        %v699 = vsel %vm695, %v691, 1.0
        %v700 = vsel %vm696, %v692, 1.0
        %v701 = vsel %vm697, %v693, 1.0
        %v702 = vrsqrt.pop %v698
        %v703 = vrsqrt.pop %v699
        %v704 = vrsqrt.pop %v700
        %v705 = vrsqrt.pop %v701
        %v706 = vmul.f32 %v560, %v594
        %v707 = vmul.f32 %v563, %v595
        %v708 = vmul.f32 %v566, %v596
        %v709 = vmul.f32 %v569, %v597
        %v710 = vmul.f32 %v674, %v560
        %v711 = vmul.f32 %v675, %v563
        %v712 = vmul.f32 %v676, %v566
        %v713 = vmul.f32 %v677, %v569
        %v714 = vsub.f32 %v572, %v710
        %v715 = vsub.f32 %v575, %v711
        %v716 = vsub.f32 %v578, %v712
        %v717 = vsub.f32 %v581, %v713
        %v718 = vmul.f32 %v714, %v702
        %v719 = vmul.f32 %v715, %v703
        %v720 = vmul.f32 %v716, %v704
        %v721 = vmul.f32 %v717, %v705
        %v722 = vsub.f32 0.0, %v648
        %v723 = vsub.f32 0.0, %v655
        %v724 = vsub.f32 0.0, %v662
        %v725 = vsub.f32 0.0, %v669
        %v726 = vmul.f32 %v702, %v706
        %v727 = vmul.f32 %v703, %v707
        %v728 = vmul.f32 %v704, %v708
        %v729 = vmul.f32 %v705, %v709
        %v730 = vmul.f32 %v726, %v674
        %v731 = vmul.f32 %v727, %v675
        %v732 = vmul.f32 %v728, %v676
        %v733 = vmul.f32 %v729, %v677
        %v734 = vmul.f32 %v594, %v718
        %v735 = vmul.f32 %v595, %v719
        %v736 = vmul.f32 %v596, %v720
        %v737 = vmul.f32 %v597, %v721
        %v738 = vadd.f32 %v730, %v734
        %v739 = vadd.f32 %v731, %v735
        %v740 = vadd.f32 %v732, %v736
        %v741 = vadd.f32 %v733, %v737
        %v742 = vmul.f32 %v722, %v738
        %v743 = vmul.f32 %v723, %v739
        %v744 = vmul.f32 %v724, %v740
        %v745 = vmul.f32 %v725, %v741
        %v746 = vmul.f32 %v594, %v706
        %v747 = vmul.f32 %v595, %v707
        %v748 = vmul.f32 %v596, %v708
        %v749 = vmul.f32 %v597, %v709
        %v750 = vmul.f32 %v702, %v718
        %v751 = vmul.f32 %v703, %v719
        %v752 = vmul.f32 %v704, %v720
        %v753 = vmul.f32 %v705, %v721
        %v754 = vmul.f32 %v750, %v674
        %v755 = vmul.f32 %v751, %v675
        %v756 = vmul.f32 %v752, %v676
        %v757 = vmul.f32 %v753, %v677
        %v758 = vsub.f32 %v746, %v754
        %v759 = vsub.f32 %v747, %v755
        %v760 = vsub.f32 %v748, %v756
        %v761 = vsub.f32 %v749, %v757
        %v762 = vmul.f32 %v670, %v758
        %v763 = vmul.f32 %v671, %v759
        %v764 = vmul.f32 %v672, %v760
        %v765 = vmul.f32 %v673, %v761
        %v766 = vadd.f32 %v742, %v762
        %v767 = vadd.f32 %v743, %v763
        %v768 = vadd.f32 %v744, %v764
        %v769 = vadd.f32 %v745, %v765
        %v770 = vmul.f32 %v648, %v726
        %v771 = vmul.f32 %v655, %v727
        %v772 = vmul.f32 %v662, %v728
        %v773 = vmul.f32 %v669, %v729
        %v774 = vmul.f32 %v670, %v750
        %v775 = vmul.f32 %v671, %v751
        %v776 = vmul.f32 %v672, %v752
        %v777 = vmul.f32 %v673, %v753
        %v778 = vadd.f32 %v770, %v774
        %v779 = vadd.f32 %v771, %v775
        %v780 = vadd.f32 %v772, %v776
        %v781 = vadd.f32 %v773, %v777
        %v782 = vmul.f32 %v766, %v476
        %v783 = vmul.f32 %v767, %v477
        %v784 = vmul.f32 %v768, %v478
        %v785 = vmul.f32 %v769, %v479
        %v786 = vmul.f32 %v778, %v488
        %v787 = vmul.f32 %v779, %v489
        %v788 = vmul.f32 %v780, %v490
        %v789 = vmul.f32 %v781, %v491
        %v790 = vadd.f32 %v782, %v786
        %v791 = vadd.f32 %v783, %v787
        %v792 = vadd.f32 %v784, %v788
        %v793 = vadd.f32 %v785, %v789
        %v794 = vld [vmem:[%s388] sm:$0x1]
        %v795 = vmul.f32 %v790, %v790
        %v796 = vmul.f32 %v791, %v791
        %v797 = vmul.f32 %v792, %v792
        %v798 = vmul.f32 %v793, %v793
        %v799 = vsel %vm586, 1, 0
        %v800 = vsel %vm587, 1, 0
        %v801 = vsel %vm588, 1, 0
        %v802 = vsel %vm589, 1, 0
        %vm803 = vcmp.eq.s32.totalorder %v799, 1
        %vm804 = vcmp.eq.s32.totalorder %v800, 1
        %vm805 = vcmp.eq.s32.totalorder %v801, 1
        %vm806 = vcmp.eq.s32.totalorder %v802, 1
        %v807 = vsel %vm803, %v795, 0.0
        %v808 = vsel %vm804, %v796, 0.0
        %v809 = vsel %vm805, %v797, 0.0
        %v810 = vsel %vm806, %v798, 0.0
        %v811 = vsel %vm513, %v807, 0.0
        %v812 = vsel %vm513, %v808, 0.0
        %v813 = vadd.f32 %v811, %v812
        %v814 = vsel %vm513, %v809, 0.0
        %v815 = vadd.f32 %v813, %v814
        %v816 = vsel %vm513, %v810, 0.0
        %v817 = vadd.f32 %v815, %v816
        %v818 = vrot.slane %v817, 4
        %v819 = vadd.f32 %v817, %v818
        %v820 = vrot.slane %v819, 2
        %v821 = vadd.f32 %v819, %v820
        %v822 = vrot.slane %v821, 1
        %v823 = vadd.f32 %v821, %v822
        %v824 = vadd.f32 %v794, %v823
        %vm825 = vcmask 253952
        %826 = vst.msk [vmem:[%s388] sm:$0x1] %vm825, %v824
        %v827 = vld [vmem:[%s458] sm:$0x1]
        %v828 = vcvt.s32.f32 %v799
        %v829 = vcvt.s32.f32 %v800
        %v830 = vcvt.s32.f32 %v801
        %v831 = vcvt.s32.f32 %v802
        %v832 = vadd.f32 %v828, %v829
        %v833 = vadd.f32 %v832, %v830
        %v834 = vadd.f32 %v833, %v831
        %v835 = vrot.slane %v834, 4
        %v836 = vadd.f32 %v834, %v835
        %v837 = vrot.slane %v836, 2
        %v838 = vadd.f32 %v836, %v837
        %v839 = vrot.slane %v838, 1
        %v840 = vadd.f32 %v838, %v839
        %v841 = vadd.f32 %v827, %v840
        %vm842 = vcmask 0
        %843 = vst.msk [vmem:[%s458] sm:$0x1] %vm842, %v841
        %v844 = vsub.f32 %v476, %v488
        %v845 = vsub.f32 %v477, %v489
        %v846 = vsub.f32 %v478, %v490
        %v847 = vsub.f32 %v479, %v491
        %v848 = vld [vmem:[%s394] sm:$0x1]
        %v849 = vmul.f32 %v844, %v844
        %v850 = vmul.f32 %v845, %v845
        %v851 = vmul.f32 %v846, %v846
        %v852 = vmul.f32 %v847, %v847
        %v853 = vsel %vm505, 1, 0
        %v854 = vsel %vm506, 1, 0
        %v855 = vsel %vm507, 1, 0
        %v856 = vsel %vm508, 1, 0
        %vm857 = vcmp.eq.s32.totalorder %v853, 1
        %vm858 = vcmp.eq.s32.totalorder %v854, 1
        %vm859 = vcmp.eq.s32.totalorder %v855, 1
        %vm860 = vcmp.eq.s32.totalorder %v856, 1
        %v861 = vsel %vm857, %v849, 0.0
        %v862 = vsel %vm858, %v850, 0.0
        %v863 = vsel %vm859, %v851, 0.0
        %v864 = vsel %vm860, %v852, 0.0
        %v865 = vsel %vm513, %v861, 0.0
        %v866 = vsel %vm513, %v862, 0.0
        %v867 = vadd.f32 %v865, %v866
        %v868 = vsel %vm513, %v863, 0.0
        %v869 = vadd.f32 %v867, %v868
        %v870 = vsel %vm513, %v864, 0.0
        %v871 = vadd.f32 %v869, %v870
        %v872 = vrot.slane %v871, 4
        %v873 = vadd.f32 %v871, %v872
        %v874 = vrot.slane %v873, 2
        %v875 = vadd.f32 %v873, %v874
        %v876 = vrot.slane %v875, 1
        %v877 = vadd.f32 %v875, %v876
        %v878 = vadd.f32 %v848, %v877
        %879 = vst.msk [vmem:[%s394] sm:$0x1] %vm825, %v878
        %s880 = sand.u32 %s180, 1
        %s881 = scalar_lea.sflag [#allocation3], %s880
        %s882 = sand.u32 %s180, 1
        %s883 = scalar_lea.vmem [#allocation2], %s882
        %s884 = sand.u32 %s206, 1
        %s885 = scalar_lea.sflag [#allocation5], %s884
        %s886 = sand.u32 %s206, 1
        %s887 = scalar_lea.vmem [#allocation4], %s886
        %p888 = scmp.lt.s32.totalorder %s28, 1
        %s889 = scalar_select %p888, %s28, 1
        %s890 = scalar_lea.vmem %s6, %s889
        // Predicated region
        $region41: #{tpu_custom_call.1} parent=35 // pred_check
          %p891 = pneg %p190
        $region42: #{tpu_custom_call.1} parent=35 // pred_check_branch
          %893 = sbr.rel (%p891) target = $region44
        $region43: #{tpu_custom_call.1} parent=35 // pred_region
          %s895 = ssub.s32 16, 16
          %896 = vsyncadd %s881, %s895
          %s897 = smul.addr %s28, 16
          %s898 = scalar_lea.hbm %s4, %s897
          %s900 = sshll.u32 %s883, 4
          %s901 = int_to_ptr.vmem [resolvable:$true] %s900
          %903 = dma.vmem_to_hbm [thread:$0]  %s901, 16, %s898, %s881
        $region44: #{tpu_custom_call.1} parent=35 // pred_fallthru
          _
        // Predicated region
        $region45: #{tpu_custom_call.1} parent=35 // pred_check
          %p904 = pneg %p216
        $region46: #{tpu_custom_call.1} parent=35 // pred_check_branch
          %906 = sbr.rel (%p904) target = $region48
        $region47: #{tpu_custom_call.1} parent=35 // pred_region
          %s908 = ssub.s32 16, 16
          %909 = vsyncadd %s885, %s908
          %s910 = smul.addr %s28, 16
          %s911 = scalar_lea.hbm %s5, %s910
          %s913 = sshll.u32 %s887, 4
          %s914 = int_to_ptr.vmem [resolvable:$true] %s913
          %916 = dma.vmem_to_hbm [thread:$0]  %s914, 16, %s911, %s885
        $region48: #{tpu_custom_call.1} parent=35 // pred_fallthru
          _
        // Predicated region
        $region49: #{tpu_custom_call.1} parent=35 // pred_check
          %p917 = pneg %p242
        $region50: #{tpu_custom_call.1} parent=35 // pred_check_branch
          %919 = sbr.rel (%p917) target = $region52
        $region51: #{tpu_custom_call.1} parent=35 // pred_region
          _
        $region52: #{tpu_custom_call.1} parent=35 // pred_fallthru
          _
      $region36: #{tpu_custom_call.1} parent=5 // pred_fallthru
        _
      %p920 = scmp.le.s32.totalorder 2, %s19
      // Predicated region
      $region53: #{tpu_custom_call.1} parent=5 // pred_check
        %p921 = pneg %p920
      $region54: #{tpu_custom_call.1} parent=5 // pred_check_branch
        %923 = sbr.rel (%p921) target = $region56
      $region55: #{tpu_custom_call.1} parent=5 // pred_region
        %s924 = ssub.s32 %s19, 2
        // Predicated region
        $region57: #{tpu_custom_call.1} parent=55 // pred_check
          %p925 = pneg %p196
        $region58: #{tpu_custom_call.1} parent=55 // pred_check_branch
          %927 = sbr.rel (%p925) target = $region60
        $region59: #{tpu_custom_call.1} parent=55 // pred_region
          %s928 = sand.u32 %s181, 1
          %s929 = scalar_lea.sflag [#allocation3], %s928
          %s930 = sand.u32 %s181, 1
          %s931 = scalar_lea.vmem [#allocation2], %s930
          %932 = dma.done %s929, 16
        $region60: #{tpu_custom_call.1} parent=55 // pred_fallthru
          _
        // Predicated region
        $region61: #{tpu_custom_call.1} parent=55 // pred_check
          %p933 = pneg %p222
        $region62: #{tpu_custom_call.1} parent=55 // pred_check_branch
          %935 = sbr.rel (%p933) target = $region64
        $region63: #{tpu_custom_call.1} parent=55 // pred_region
          %s936 = sand.u32 %s207, 1
          %s937 = scalar_lea.sflag [#allocation5], %s936
          %s938 = sand.u32 %s207, 1
          %s939 = scalar_lea.vmem [#allocation4], %s938
          %940 = dma.done %s937, 16
        $region64: #{tpu_custom_call.1} parent=55 // pred_fallthru
          _
        // Predicated region
        $region65: #{tpu_custom_call.1} parent=55 // pred_check
          %p941 = pneg %p248
        $region66: #{tpu_custom_call.1} parent=55 // pred_check_branch
          %943 = sbr.rel (%p941) target = $region68
        $region67: #{tpu_custom_call.1} parent=55 // pred_region
          %p944 = scmp.lt.s32.totalorder %s30, 1
          %s945 = scalar_select %p944, %s30, 1
          %s946 = scalar_lea.vmem %s6, %s945
        $region68: #{tpu_custom_call.1} parent=55 // pred_fallthru
          _
      $region56: #{tpu_custom_call.1} parent=5 // pred_fallthru
        _
    $region6: #{tpu_custom_call.1} parent=1 // loop_footer
      %s23 = sadd.s32 1, %s19
    $region7: #{tpu_custom_call.1} parent=1 // loop_footer_branch
      %18 = sbr.rel target = $region3
    $region8: #{tpu_custom_call.1} parent=1 // loop_exit
      _
    %947 = vsyncpa [#allocation3], 1
    %s948 = scalar_lea.sflag [#allocation3], 1
    %949 = vsyncpa %s948, 1
    %950 = vsyncpa [#allocation5], 1
    %s951 = scalar_lea.sflag [#allocation5], 1
    %952 = vsyncpa %s951, 1

</llo_original>
